<compile_context>
chip_gen: v5e
topology: v5e:2x2
jax: 0.10.0
libtpu: 0.0.40
codegen_flags: <defaults>
</compile_context>

<pallas_src>
from functools import partial

import jax
import jax.numpy as jnp
import numpy as np
from jax.experimental import pallas as pl
from jax.experimental.pallas import tpu as pltpu

LANE = 128       # vreg lane width
SUBLANE = 8      # vreg sublane count (f32/i32)
MAX_TILE = 8192  # max lanes per grid step; (8, 8192) i32 block = 256 KiB, trivially fits VMEM


def _make_to_binary_kernel(n_bits: int):
    """Kernel factory.  x_ref: (1, TILE) int32 lane-dense feature values.
    o_ref: (SUB, TILE) int32, SUB = n_bits rounded up to 8 sublanes.
    Row j holds bit (n_bits-1-j) of every value (MSB first); padding rows
    (j >= n_bits) use a clamped shift of 0 and are sliced away outside."""

    def kernel(x_ref, o_ref):
        x = x_ref[...]                                            # (1, TILE) int32
        sub, ln = o_ref.shape
        row = jax.lax.broadcasted_iota(jnp.int32, (sub, ln), dimension=0)
        # shift = n_bits-1-j, clamped to >= 0 so padded sublane rows stay defined.
        shifts = jnp.maximum((n_bits - 1) - row, 0)
        xb = jnp.broadcast_to(x, (sub, ln))                       # sublane broadcast (cheap)
        # Arithmetic right shift + &1 matches torch bitwise_and(mask).ne(0),
        # including negative two's-complement ints.  (n_bits must be <= 32.)
        o_ref[...] = jnp.bitwise_and(jnp.right_shift(xb, shifts), 1)

    return kernel


@partial(jax.jit, static_argnames=("n_bits",))
def to_binary_bits(feature: jax.Array, *, n_bits: int) -> jax.Array:
    """Binary-expand a 1-D int feature vector -> flat uint8 bits (MSB first per element)."""
    F = int(feature.shape[0])
    if F == 0:
        return jnp.zeros((0,), jnp.uint8)

    # Lane tiling: whole vector in one step when it fits, else 8192-lane chunks.
    f_lane = ((F + LANE - 1) // LANE) * LANE
    tile = min(f_lane, MAX_TILE)
    f_pad = ((F + tile - 1) // tile) * tile
    sub = ((n_bits + SUBLANE - 1) // SUBLANE) * SUBLANE          # pad bit-rows to 8

    # Single fused pad (no zeros().at[].set extra HBM pass).  Zero fill -> zero
    # bits, sliced away below.  astype(int32) truncates like torch .int().
    x = jnp.pad(feature.astype(jnp.int32), (0, f_pad - F)).reshape(1, f_pad)

    out = pl.pallas_call(
        _make_to_binary_kernel(n_bits),
        out_shape=jax.ShapeDtypeStruct((sub, f_pad), jnp.int32),
        grid=(f_pad // tile,),
        in_specs=[pl.BlockSpec((1, tile), lambda i: (0, i))],
        out_specs=pl.BlockSpec((sub, tile), lambda i: (0, i)),
        compiler_params=pltpu.CompilerParams(dimension_semantics=("parallel",)),
    )(x)

    # Drop sublane/lane padding, cast to 1-byte BEFORE the transpose so the XLA
    # relayout pass moves 4x fewer bytes, then flatten element-major MSB-first:
    # output index i*n_bits + j  <->  bit j of feature[i].
    bits = out[:n_bits, :F].astype(jnp.uint8)                     # (n_bits, F) uint8
    return bits.T.reshape(-1)


@partial(jax.jit, static_argnames=("n_bits",))
def to_binary_bits_batch(features: jax.Array, *, n_bits: int) -> jax.Array:
    """Batched variant: (B, F) int features -> (B, F*n_bits) uint8 bits in ONE launch."""
    B, F = features.shape
    flat = to_binary_bits(features.reshape(-1), n_bits=n_bits)
    return flat.reshape(B, F * n_bits)


class ToBinaryPallas:
    """JAX/Pallas analogue of the PyTorch `ToBinary` transform."""

    def __init__(self, n_bits: int = 6):
        self.n_bits = n_bits

    def forward(self, sample):
        sid, content, label, spacied, feature = sample
        # TODO(synk): the empty-feature passthrough is host-side Python control
        # flow (fine eagerly, not jit-traceable) — same behavior as the torch module.
        if len(feature) == 0:
            return (sid, content, label, spacied, feature)
        feature = jnp.asarray(feature)
        bits = to_binary_bits(feature, n_bits=self.n_bits)
        return (sid, content, label, spacied, bits)

    __call__ = forward


def _ref_bits(feat_np, n_bits):
    feat_np = np.asarray(feat_np).astype(np.int64)
    mask = (2 ** np.arange(n_bits - 1, -1, -1)).astype(np.int64)
    return ((feat_np[..., None] & mask) != 0).astype(np.uint8)


if __name__ == "__main__":
    key = jax.random.PRNGKey(0)
    n_bits = 6

    # --- single-sample path (small F, single grid step) -------------------
    feat_dim = 32
    k0, k1, k2 = jax.random.split(key, 3)
    feature = jax.random.randint(k0, (feat_dim,), 0, 100, dtype=jnp.int32)
    sample = ("sid-0", "example content", 1, ["tok"] * 8, feature)

    module = ToBinaryPallas(n_bits=n_bits)
    sid, content, label, spacied, bits = module(sample)
    bits = jax.block_until_ready(bits)

    ref = _ref_bits(feature, n_bits).reshape(-1)
    assert bits.shape == (feat_dim * n_bits,)
    assert bits.dtype == jnp.uint8
    np.testing.assert_array_equal(np.asarray(bits), ref)

    # --- empty-feature passthrough ----------------------------------------
    empty_sample = ("sid-1", "empty", 0, [], jnp.zeros((0,), jnp.float32))
    out_empty = module(empty_sample)
    assert out_empty[4].shape == (0,)

    # --- batched path (one launch for many samples) ------------------------
    batch = jax.random.randint(k1, (2, 16), -64, 100, dtype=jnp.int32)
    bbits = jax.block_until_ready(to_binary_bits_batch(batch, n_bits=n_bits))
    bref = _ref_bits(batch, n_bits).reshape(2, -1)
    assert bbits.shape == (2, 16 * n_bits) and bbits.dtype == jnp.uint8
    np.testing.assert_array_equal(np.asarray(bbits), bref)

    # --- long vector (exercises multi-tile grid + padding, incl. negatives) --
    long_dim = 9000  # > 8192 lanes -> 2 grid steps
    long_feat = jax.random.randint(k2, (long_dim,), -128, 1000, dtype=jnp.int32)
    lbits = jax.block_until_ready(to_binary_bits(long_feat, n_bits=n_bits))
    lref = _ref_bits(long_feat, n_bits).reshape(-1)
    assert lbits.shape == (long_dim * n_bits,)
    np.testing.assert_array_equal(np.asarray(lbits), lref)

    print("KERNEL_OK")
</pallas_src>

<mosaic_0001>
module attributes {stable_mosaic.version = 11 : i64} {
  func.func @kernel(%arg0: i32, %arg1: memref<1x128xi32, #tpu.memory_space<vmem>>, %arg2: memref<8x128xi32, #tpu.memory_space<vmem>>) attributes {dimension_semantics = [#tpu.dimension_semantics<parallel>], iteration_bounds = array<i64: 1>, scalar_prefetch = 0 : i64, scratch_operands = 0 : i64, tpu.core_type = #tpu.core_type<tc>, window_params = [{transform_indices = @transform_0, window_bounds = array<i64: 1, 128>}, {transform_indices = @transform_1, window_bounds = array<i64: 8, 128>}]} {
    %c0 = arith.constant 0 : index
    %c0_0 = arith.constant 0 : index
    %0 = vector.load %arg1[%c0, %c0_0] : memref<1x128xi32, #tpu.memory_space<vmem>>, vector<1x128xi32>
    %1 = tpu.iota {dimensions = array<i32: 0>} : vector<8x128xi32>
    %c5_i32 = arith.constant 5 : i32
    %2 = vector.broadcast %c5_i32 : i32 to vector<8x128xi32>
    %3 = arith.subi %2, %1 : vector<8x128xi32>
    %c0_i32 = arith.constant 0 : i32
    %4 = vector.broadcast %c0_i32 : i32 to vector<8x128xi32>
    %5 = arith.maxsi %3, %4 : vector<8x128xi32>
    %6 = vector.shape_cast %0 : vector<1x128xi32> to vector<1x128xi32>
    %7 = vector.broadcast %6 : vector<1x128xi32> to vector<8x128xi32>
    %8 = arith.shrsi %7, %5 : vector<8x128xi32>
    %c1_i32 = arith.constant 1 : i32
    %9 = vector.broadcast %c1_i32 : i32 to vector<8x128xi32>
    %10 = arith.andi %8, %9 : vector<8x128xi32>
    %c0_1 = arith.constant 0 : index
    %c0_2 = arith.constant 0 : index
    %11 = vector.load %arg2[%c0_1, %c0_2] : memref<8x128xi32, #tpu.memory_space<vmem>>, vector<8x128xi32>
    tpu.vector_store %arg2[%c0_1, %c0_2], %10 {strides = array<i32>} : memref<8x128xi32, #tpu.memory_space<vmem>>, vector<8x128xi32>,
    return
  }
  func.func @transform_0(%arg0: i32) -> (i32, i32) {
    %c0_i32 = arith.constant 0 : i32
    %c0_i32_0 = arith.constant 0 : i32
    return %c0_i32, %arg0 : i32, i32
  }
  func.func @transform_1(%arg0: i32) -> (i32, i32) {
    %c0_i32 = arith.constant 0 : i32
    %c0_i32_0 = arith.constant 0 : i32
    return %c0_i32, %arg0 : i32, i32
  }
}

</mosaic_0001>

<llo_original>
// kernel: to_binary_bits.1
$region0: #{to_binary_bits.1}
  #allocation0 [shape = 'u32[]', space=smem, size = 0x4, offset = 0x4, fixed_abs, tag = 'smem constant byte address 0x4 - core index']
  #allocation1 [shape = 'u32[72,128]{1,0:T(1,128)}', space=vmem, size = 0x9000, scoped, tag = 'internal scratch']
  %s0 = inlined_call_operand.vmem [shape: s32[1,128], index: 0, kind: input, shape index: {}]
  %s1 = inlined_call_operand.vmem [shape: s32[8,128], index: 1, kind: output, shape index: {}]
  %s2 = sld [smem:[#allocation0]]
  $region14: #{to_binary_bits.1} parent=0
    _
  %s4 = ssub.s32 1, %s2
  %s5 = scalar_select 0, %s4, %s2
  // Predicated region
  $region2: #{to_binary_bits.1} parent=0 // pred_check
    _
  $region3: #{to_binary_bits.1} parent=0 // pred_check_branch
    %7 = sbr.rel (0) target = $region5
  $region4: #{to_binary_bits.1} parent=0 // pred_region
    _
  $region5: #{to_binary_bits.1} parent=0 // pred_fallthru
    _
  %v8 = vld [vmem:[%s0] sm:$0x1]
  %v9 = vlaneseq
  %v10 = vshrl.u32 %v9, 7
  %v11 = vsub.s32 5, %v10
  %vm12 = vcmp.gt.s32.totalorder %v11, 0
  %v13 = vsel %vm12, %v11, 0
  %v14 = vperm.slane %v8, 0
  %v15 = vshra.s32 %v14, %v13
  %v16 = vand.u32 %v15, 1
  %17 = vst [vmem:[%s1] sm:$0xff] %v16
  // Predicated region
  $region6: #{to_binary_bits.1} parent=0 // pred_check
    _
  $region7: #{to_binary_bits.1} parent=0 // pred_check_branch
    %19 = sbr.rel (0) target = $region9
  $region8: #{to_binary_bits.1} parent=0 // pred_region
    _
  $region9: #{to_binary_bits.1} parent=0 // pred_fallthru
    _
  // Predicated region
  $region10: #{to_binary_bits.1} parent=0 // pred_check
    _
  $region11: #{to_binary_bits.1} parent=0 // pred_check_branch
    %21 = sbr.rel (0) target = $region13
  $region12: #{to_binary_bits.1} parent=0 // pred_region
    _
  $region13: #{to_binary_bits.1} parent=0 // pred_fallthru
    _

</llo_original>
